<compile_context>
chip_gen: v7x
topology: tpu7x:2x2x1
jax: 0.10.0
libtpu: 0.0.40
codegen_flags: <defaults>
</compile_context>

<pallas_src>
import functools
import math

import numpy as np
import jax
import jax.numpy as jnp
from jax.experimental import pallas as pl
from jax.experimental.pallas import tpu as pltpu


def _round_up(x, m):
    return ((x + m - 1) // m) * m


def _cdiv(a, b):
    return (a + b - 1) // b


def _vmem_limits():
    """Chip-aware (v5e/v6e: 128 MiB, v7x: 64 MiB) VMEM limit + tiling budget."""
    cap = 128 * 1024 * 1024
    try:
        cap = int(pltpu.get_tpu_info().vmem_capacity_bytes)
    except Exception:
        pass
    limit = max(32 * 1024 * 1024, min(cap - 16 * 1024 * 1024, 96 * 1024 * 1024))
    budget = max(8 * 1024 * 1024, limit // 3)
    return limit, budget


def _pick_l_tile(l_out, c_in, c_out, k, stride, itemsize, granule, cap,
                 budget_bytes):
    """Largest L_out tile (multiple of `granule`, <= cap) within a VMEM budget."""
    cap = max(granule, (cap // granule) * granule)
    tl = min(cap, _round_up(max(l_out, 1), granule))

    def est(t):
        return itemsize * (
            2 * c_in * t * stride          # main input tile, double-buffered
            + 2 * c_in * granule           # halo tile, double-buffered
            + 2 * c_out * t                # output tile, double-buffered
            + 2 * k * c_in * t             # im2col panel scratch + temporaries
            + 2 * c_out * k * c_in)        # folded weights, double-buffered

    while tl > granule and est(tl) > budget_bytes:
        tl -= granule
    return tl


def _conv1d_kernel(x_ref, xh_ref, w_ref, b_ref, o_ref, panel_ref, *,
                   kernel_size, stride, dilation, tl_out):
    """One (batch, L-tile) grid step.

    x_ref:     (1, C_in, TL_out*stride)  main input tile (lane-aligned)
    xh_ref:    (1, C_in, HALO_BLK)       right halo (start of next tile)
    w_ref:     (C_out, K*C_in)           folded weights (tap-major)
    b_ref:     (C_out, 1)                bias (f32)
    o_ref:     (1, C_out, TL_out)        output tile
    panel_ref: (K*C_in, TL_out)          im2col panel scratch (VMEM)
    """
    c_in = x_ref.shape[1]

    # Main tile + halo: every tap's shifted window is available locally.
    xcat = jnp.concatenate([x_ref[0], xh_ref[0]], axis=-1)   # (C_in, TL_in+HALO)

    # Build the folded (K*C_in, TL_out) panel: K shifted copies of the input.
    # Folding K into the contraction -> one big MXU dot instead of K small ones.
    for k in range(kernel_size):
        start = k * dilation
        if stride == 1:
            x_k = xcat[:, start:start + tl_out]
        else:
            # TODO(synk): stride > 1 uses a lane-strided gather; a polyphase
            # decomposition in the wrapper would keep it off the hot path.
            x_k = jax.lax.slice(
                xcat, (0, start),
                (c_in, start + (tl_out - 1) * stride + 1), (1, stride))
        panel_ref[k * c_in:(k + 1) * c_in, :] = x_k

    acc = jnp.dot(w_ref[...], panel_ref[...],
                  preferred_element_type=jnp.float32)        # (C_out, TL_out)
    acc += b_ref[...]                                        # broadcast over L
    o_ref[0] = acc.astype(o_ref.dtype)


def conv_norm(x, weight, bias, *, stride=1, padding=None, dilation=1,
              l_tile=1024, compute_dtype=None):
    """Pallas implementation of ConvNorm.forward (torch.nn.Conv1d semantics)."""
    b, c_in, l = x.shape
    c_out, c_in_w, k = weight.shape
    assert c_in == c_in_w
    if padding is None:
        assert k % 2 == 1
        padding = int(dilation * (k - 1) / 2)

    out_dtype = x.dtype
    l_out = (l + 2 * padding - dilation * (k - 1) - 1) // stride + 1
    assert l_out > 0

    halo = dilation * (k - 1)
    halo_blk = _round_up(max(halo, 1), 128)        # lane-aligned halo block

    itemsize = (np.dtype(compute_dtype).itemsize if compute_dtype is not None
                else np.dtype(x.dtype).itemsize)
    vmem_limit, vmem_budget = _vmem_limits()
    tl = _pick_l_tile(l_out, c_in, c_out, k, stride, itemsize,
                      granule=halo_blk, cap=l_tile, budget_bytes=vmem_budget)
    n_tiles = _cdiv(l_out, tl)
    l_out_pad = n_tiles * tl
    tl_in = tl * stride                            # main input block width
    assert tl_in % halo_blk == 0

    # Pad so every (main, halo) input block is fully in bounds; the extra zeros
    # only feed output columns >= l_out, which are sliced off below.
    l_total = n_tiles * tl_in + halo_blk
    x_pad = jnp.pad(x, ((0, 0), (0, 0), (padding, l_total - l - padding)))

    # Fold taps into the contraction: (C_out, C_in, K) -> (C_out, K*C_in),
    # tap-major to match the panel layout built in the kernel.
    w_folded = jnp.transpose(weight, (0, 2, 1)).reshape(c_out, k * c_in)
    bias2d = bias.reshape(c_out, 1).astype(jnp.float32)

    if compute_dtype is not None:                  # e.g. jnp.bfloat16 MXU inputs
        x_pad = x_pad.astype(compute_dtype)
        w_folded = w_folded.astype(compute_dtype)

    kernel = functools.partial(
        _conv1d_kernel, kernel_size=k, stride=stride, dilation=dilation,
        tl_out=tl)

    cost = pl.CostEstimate(
        flops=2 * b * c_out * c_in * k * l_out,
        transcendentals=0,
        bytes_accessed=int(x_pad.size * x_pad.dtype.itemsize
                           + w_folded.size * w_folded.dtype.itemsize
                           + bias2d.size * bias2d.dtype.itemsize
                           + b * c_out * l_out_pad * np.dtype(out_dtype).itemsize))

    halo_blocks_per_tile = tl_in // halo_blk

    out_padded = pl.pallas_call(
        kernel,
        out_shape=jax.ShapeDtypeStruct((b, c_out, l_out_pad), out_dtype),
        grid_spec=pltpu.PrefetchScalarGridSpec(
            num_scalar_prefetch=0,
            grid=(b, n_tiles),
            in_specs=[
                # main input tile
                pl.BlockSpec((1, c_in, tl_in), lambda bi, j: (bi, 0, j)),
                # right halo: first halo_blk lanes of the *next* tile
                pl.BlockSpec((1, c_in, halo_blk),
                             lambda bi, j: (bi, 0, (j + 1) * halo_blocks_per_tile)),
                # folded weights + bias stay resident (constant index map)
                pl.BlockSpec((c_out, k * c_in), lambda bi, j: (0, 0)),
                pl.BlockSpec((c_out, 1), lambda bi, j: (0, 0)),
            ],
            out_specs=pl.BlockSpec((1, c_out, tl), lambda bi, j: (bi, 0, j)),
            scratch_shapes=[pltpu.VMEM((k * c_in, tl), x_pad.dtype)],
        ),
        compiler_params=pltpu.CompilerParams(
            dimension_semantics=("parallel", "parallel"),
            vmem_limit_bytes=vmem_limit,
        ),
        cost_estimate=cost,
    )(x_pad, x_pad, w_folded, bias2d)

    return out_padded[:, :, :l_out]


def xavier_uniform(key, shape, gain=1.0, dtype=jnp.float32):
    # shape = (C_out, C_in, K); fan_in = C_in*K, fan_out = C_out*K (PyTorch conv)
    c_out, c_in, k = shape
    fan_in, fan_out = c_in * k, c_out * k
    limit = gain * math.sqrt(6.0 / (fan_in + fan_out))
    return jax.random.uniform(key, shape, dtype=dtype, minval=-limit, maxval=limit)


def _conv1d_ref(x, w, bias, stride, padding, dilation):
    out = jax.lax.conv_general_dilated(
        x, w, window_strides=(stride,), padding=[(padding, padding)],
        rhs_dilation=(dilation,), dimension_numbers=("NCH", "OIH", "NCH"))
    return out + bias[None, :, None]


if __name__ == "__main__":
    key = jax.random.PRNGKey(0)
    kx, kw, kb, kx2, kw2, kb2 = jax.random.split(key, 6)

    # ConvNorm(4, 6, kernel_size=3): padding=1, stride=1 (single L tile).
    B, C_IN, C_OUT, L, K = 2, 4, 6, 16, 3
    x = jax.random.normal(kx, (B, C_IN, L), dtype=jnp.float32)
    weight = xavier_uniform(kw, (C_OUT, C_IN, K), gain=1.0)   # w_init_gain='linear'
    bound = 1.0 / math.sqrt(C_IN * K)                         # Conv1d bias init
    bias = jax.random.uniform(kb, (C_OUT,), minval=-bound, maxval=bound)

    out = jax.block_until_ready(conv_norm(x, weight, bias))
    ref = _conv1d_ref(x, weight, bias, stride=1, padding=1, dilation=1)
    assert out.shape == (B, C_OUT, L)
    assert jnp.allclose(out, ref, atol=1e-5, rtol=1e-5)

    # Multi-tile path (exercises the halo): ConvNorm(8, 16, kernel_size=5), L=300.
    B2, C_IN2, C_OUT2, L2, K2 = 2, 8, 16, 300, 5
    x2 = jax.random.normal(kx2, (B2, C_IN2, L2), dtype=jnp.float32)
    w2 = xavier_uniform(kw2, (C_OUT2, C_IN2, K2), gain=1.0)
    bound2 = 1.0 / math.sqrt(C_IN2 * K2)
    bias2 = jax.random.uniform(kb2, (C_OUT2,), minval=-bound2, maxval=bound2)

    out2 = jax.block_until_ready(conv_norm(x2, w2, bias2, l_tile=128))
    ref2 = _conv1d_ref(x2, w2, bias2, stride=1, padding=2, dilation=1)
    assert out2.shape == (B2, C_OUT2, L2)
    assert jnp.allclose(out2, ref2, atol=1e-4, rtol=1e-4)

    print("KERNEL_OK")
</pallas_src>

<mosaic_0001>
module attributes {stable_mosaic.version = 11 : i64} {
  func.func @_conv1d_kernel(%arg0: i32, %arg1: i32, %arg2: memref<1x4x128xf32, #tpu.memory_space<vmem>>, %arg3: memref<1x4x128xf32, #tpu.memory_space<vmem>>, %arg4: memref<6x12xf32, #tpu.memory_space<vmem>>, %arg5: memref<6x1xf32, #tpu.memory_space<vmem>>, %arg6: memref<1x6x128xf32, #tpu.memory_space<vmem>>, %arg7: memref<12x128xf32, #tpu.memory_space<vmem>>) attributes {dimension_semantics = [#tpu.dimension_semantics<parallel>, #tpu.dimension_semantics<parallel>], iteration_bounds = array<i64: 2, 1>, scalar_prefetch = 0 : i64, scratch_operands = 1 : i64, tpu.core_type = #tpu.core_type<tc>, window_params = [{transform_indices = @transform_0, window_bounds = array<i64: 1, 4, 128>}, {transform_indices = @transform_1, window_bounds = array<i64: 1, 4, 128>}, {pipeline_mode = #tpu.pipeline_mode<synchronous>, transform_indices = @transform_2, window_bounds = array<i64: 6, 12>}, {pipeline_mode = #tpu.pipeline_mode<synchronous>, transform_indices = @transform_3, window_bounds = array<i64: 6, 1>}, {transform_indices = @transform_4, window_bounds = array<i64: 1, 6, 128>}]} {
    %c0 = arith.constant 0 : index
    %c0_0 = arith.constant 0 : index
    %c0_1 = arith.constant 0 : index
    %0 = vector.load %arg2[%c0, %c0_0, %c0_1] : memref<1x4x128xf32, #tpu.memory_space<vmem>>, vector<1x4x128xf32>
    %1 = vector.shape_cast %0 : vector<1x4x128xf32> to vector<4x128xf32>
    %c0_2 = arith.constant 0 : index
    %c0_3 = arith.constant 0 : index
    %c0_4 = arith.constant 0 : index
    %2 = vector.load %arg3[%c0_2, %c0_3, %c0_4] : memref<1x4x128xf32, #tpu.memory_space<vmem>>, vector<1x4x128xf32>
    %3 = vector.shape_cast %2 : vector<1x4x128xf32> to vector<4x128xf32>
    %4 = tpu.concatenate %1, %3 in 1 : vector<4x128xf32>, vector<4x128xf32> -> vector<4x256xf32>
    %5 = vector.extract_strided_slice %4 {offsets = [0, 0], sizes = [4, 128], strides = [1, 1]} : vector<4x256xf32> to vector<4x128xf32>
    %c0_5 = arith.constant 0 : index
    %c0_6 = arith.constant 0 : index
    %6 = vector.load %arg7[%c0_5, %c0_6] : memref<12x128xf32, #tpu.memory_space<vmem>>, vector<4x128xf32>
    tpu.vector_store %arg7[%c0_5, %c0_6], %5 {strides = array<i32>} : memref<12x128xf32, #tpu.memory_space<vmem>>, vector<4x128xf32>,
    %7 = vector.extract_strided_slice %4 {offsets = [0, 1], sizes = [4, 128], strides = [1, 1]} : vector<4x256xf32> to vector<4x128xf32>
    %c4 = arith.constant 4 : index
    %c0_7 = arith.constant 0 : index
    %8 = vector.load %arg7[%c4, %c0_7] : memref<12x128xf32, #tpu.memory_space<vmem>>, vector<4x128xf32>
    tpu.vector_store %arg7[%c4, %c0_7], %7 {strides = array<i32>} : memref<12x128xf32, #tpu.memory_space<vmem>>, vector<4x128xf32>,
    %9 = vector.extract_strided_slice %4 {offsets = [0, 2], sizes = [4, 128], strides = [1, 1]} : vector<4x256xf32> to vector<4x128xf32>
    %c8 = arith.constant 8 : index
    %c0_8 = arith.constant 0 : index
    %10 = vector.load %arg7[%c8, %c0_8] : memref<12x128xf32, #tpu.memory_space<vmem>>, vector<4x128xf32>
    tpu.vector_store %arg7[%c8, %c0_8], %9 {strides = array<i32>} : memref<12x128xf32, #tpu.memory_space<vmem>>, vector<4x128xf32>,
    %c0_9 = arith.constant 0 : index
    %c0_10 = arith.constant 0 : index
    %11 = vector.load %arg4[%c0_9, %c0_10] : memref<6x12xf32, #tpu.memory_space<vmem>>, vector<6x12xf32>
    %c0_11 = arith.constant 0 : index
    %c0_12 = arith.constant 0 : index
    %12 = vector.load %arg7[%c0_11, %c0_12] : memref<12x128xf32, #tpu.memory_space<vmem>>, vector<12x128xf32>
    %cst = arith.constant dense<0.000000e+00> : vector<6x128xf32>
    %13 = tpu.matmul %11, %12, %cst {dimension_numbers = #tpu.dot_dimension_numbers<[1], [0], [0], [1], [0, 0, 1, 1], [], []>} : vector<6x12xf32>, vector<12x128xf32>, vector<6x128xf32> -> vector<6x128xf32>
    %c0_13 = arith.constant 0 : index
    %c0_14 = arith.constant 0 : index
    %14 = vector.load %arg5[%c0_13, %c0_14] : memref<6x1xf32, #tpu.memory_space<vmem>>, vector<6x1xf32>
    %15 = vector.broadcast %14 : vector<6x1xf32> to vector<6x128xf32>
    %16 = arith.addf %13, %15 : vector<6x128xf32>
    %c0_15 = arith.constant 0 : index
    %c0_16 = arith.constant 0 : index
    %c0_17 = arith.constant 0 : index
    %17 = vector.load %arg6[%c0_15, %c0_16, %c0_17] : memref<1x6x128xf32, #tpu.memory_space<vmem>>, vector<1x6x128xf32>
    %18 = vector.shape_cast %17 : vector<1x6x128xf32> to vector<6x128xf32>
    %19 = vector.shape_cast %16 : vector<6x128xf32> to vector<1x6x128xf32>
    tpu.vector_store %arg6[%c0_15, %c0_16, %c0_17], %19 {strides = array<i32>} : memref<1x6x128xf32, #tpu.memory_space<vmem>>, vector<1x6x128xf32>,
    return
  }
  func.func @transform_0(%arg0: i32, %arg1: i32) -> (i32, i32, i32) {
    %c0_i32 = arith.constant 0 : i32
    %c0_i32_0 = arith.constant 0 : i32
    return %arg0, %c0_i32, %arg1 : i32, i32, i32
  }
  func.func @transform_1(%arg0: i32, %arg1: i32) -> (i32, i32, i32) {
    %c1_i32 = arith.constant 1 : i32
    %0 = arith.addi %arg1, %c1_i32 : i32
    %c1_i32_0 = arith.constant 1 : i32
    %1 = arith.muli %0, %c1_i32_0 : i32
    %c0_i32 = arith.constant 0 : i32
    %c0_i32_1 = arith.constant 0 : i32
    return %arg0, %c0_i32, %1 : i32, i32, i32
  }
  func.func @transform_2(%arg0: i32, %arg1: i32) -> (i32, i32) {
    %c0_i32 = arith.constant 0 : i32
    %c0_i32_0 = arith.constant 0 : i32
    %c0_i32_1 = arith.constant 0 : i32
    return %c0_i32, %c0_i32_0 : i32, i32
  }
  func.func @transform_3(%arg0: i32, %arg1: i32) -> (i32, i32) {
    %c0_i32 = arith.constant 0 : i32
    %c0_i32_0 = arith.constant 0 : i32
    %c0_i32_1 = arith.constant 0 : i32
    return %c0_i32, %c0_i32_0 : i32, i32
  }
  func.func @transform_4(%arg0: i32, %arg1: i32) -> (i32, i32, i32) {
    %c0_i32 = arith.constant 0 : i32
    %c0_i32_0 = arith.constant 0 : i32
    return %arg0, %c0_i32, %arg1 : i32, i32, i32
  }
}

</mosaic_0001>

<llo_original>
// kernel: tpu_custom_call.1
$region0: #{tpu_custom_call.1}
  #allocation0 [shape = 'u32[]', space=smem, size = 0x4, offset = 0x4, fixed_abs, tag = 'smem constant byte address 0x4 - core index']
  #allocation1 [shape = 'u32[144,128]{1,0:T(1,128)}', space=vmem, size = 0x12000, scoped, tag = 'internal scratch']
  #allocation2 [shape = 'f32[12,128]{1,0:T(8,128)}', space=vmem, size = 0x2000, scoped, tag = 'scratch operand']
  %s0 = inlined_call_operand.hbm [shape: f32[2,4,256], index: 0, kind: input, shape index: {}]
  %s1 = inlined_call_operand.hbm [shape: f32[2,4,256], index: 1, kind: input, shape index: {}]
  %s2 = inlined_call_operand.hbm [shape: f32[6,12], index: 2, kind: input, shape index: {}]
  %s3 = inlined_call_operand.hbm [shape: f32[6,1], index: 3, kind: input, shape index: {}]
  %s4 = inlined_call_operand.hbm [shape: f32[2,6,128], index: 4, kind: output, shape index: {}]
  %s5 = sld [smem:[#allocation0]]
  $region65: #{tpu_custom_call.1} parent=0
    _
  %s7 = ssub.s32 1, %s5
  %s8 = scalar_select 0, %s7, %s5
  $region1: #{tpu_custom_call.1} parent=0
    #allocation3 [shape = 'u8[4096]{0}', space=vmem, size = 0x1000, scoped, tag = 'input window, operand 0']
    #allocation4 [shape = 's32[2]{0}', space=sflag, size = 0x8, scoped, tag = 'scoped memory for tpu_custom_call.1']
    #allocation5 [shape = 's32[2]{0}', space=sflag, size = 0x8, scoped, tag = 'scoped memory for tpu_custom_call.1']
    #allocation6 [shape = 'u8[4096]{0}', space=vmem, size = 0x1000, scoped, tag = 'input window, operand 1']
    #allocation7 [shape = 's32[2]{0}', space=sflag, size = 0x8, scoped, tag = 'scoped memory for tpu_custom_call.1']
    #allocation8 [shape = 'u8[4096]{0}', space=vmem, size = 0x1000, scoped, tag = 'input window, operand 2, single buffered']
    #allocation9 [shape = 'u8[4096]{0}', space=vmem, size = 0x1000, scoped, tag = 'input window, operand 3, single buffered']
    #allocation10 [shape = 's32[1]{0}', space=sflag, size = 0x4, scoped, tag = 'scoped memory for tpu_custom_call.1']
    #allocation11 [shape = 'u8[8192]{0}', space=vmem, size = 0x2000, scoped, tag = 'output window, operand 0']
    %9 = vsyncpa [#allocation4], 0
    %s10 = scalar_lea.sflag [#allocation4], 1
    %11 = vsyncpa %s10, 0
    %12 = vsyncpa [#allocation7], 0
    %s13 = scalar_lea.sflag [#allocation7], 1
    %14 = vsyncpa %s13, 0
    %15 = vsyncpa [#allocation10], 0
    %16 = vsyncpa [#allocation5], 0
    %s17 = scalar_lea.sflag [#allocation5], 1
    %18 = vsyncpa %s17, 0
    loop: start=0, step=1, limit=4
    $region2: #{tpu_custom_call.1} parent=1 // loop_pre_header
      _
    $region3: #{tpu_custom_call.1} parent=1 // loop_header
      %s20 = sphi 0, %s24
      %p21 = scmp.ge.s32.totalorder %s20, 4
      %s27 = sphi 0, %s39
      %s28 = sphi 0, %s35
      %s29 = sphi 0, %s27
      %s30 = sphi 0, %s28
      %s31 = sphi 0, %s29
      %s32 = sphi 0, %s30
      %s44 = sphi 0, %s46
      %s47 = sphi 0, %s44
      %s48 = sphi 0, %s47
      %s64 = sphi 0, %s48
      %s74 = sphi 0, %s76
      %s77 = sphi 0, %s74
      %s78 = sphi 0, %s77
      %s94 = sphi 0, %s78
      %s98 = sphi 0, %s98
      %s100 = sphi 0, %s98
      %s101 = sphi 0, %s100
      %s115 = sphi 0, %s101
      %s119 = sphi 0, %s119
      %s121 = sphi 0, %s119
      %s122 = sphi 0, %s121
      %s136 = sphi 0, %s122
      %s144 = sphi 0, %s146
      %s147 = sphi 0, %s144
      %s148 = sphi 0, %s147
      %s164 = sphi 0, %s148
    $region4: #{tpu_custom_call.1} parent=1 // loop_header_branch
      %23 = sbr.rel (%p21) target = $region8
    $region5: #{tpu_custom_call.1} parent=1 // loop_body
      %s25 = ssub.s32 %s20, 1
      %s26 = ssub.s32 %s20, 2
      %s33 = sadd.s32 1, %s28
      %p34 = scmp.ge.s32.totalorder %s33, 1
      %s35 = scalar_select %p34, 0, %s33
      %s36 = sadd.s32 1, %s27
      %s37 = scalar_select %p34, %s36, %s27
      %p38 = scmp.ge.s32.totalorder %s37, 2
      %s39 = scalar_select %p38, 0, %s37
      %s40 = ssub.s32 %s27, %s39
      %s41 = ssub.s32 %s28, %s35
      %s42 = sor.u32 %s40, %s41
      %p43 = scmp.eq.s32.totalorder %s42, 0
      %s45 = sadd.s32 %s44, 1
      %s46 = scalar_select %p43, %s44, %s45
      %p49 = pneg %p43
      %p50 = scmp.eq.s32.totalorder %s20, 1
      %p51 = por %p49, %p50
      %p52 = scmp.ne.s32.totalorder %s44, %s47
      %p53 = scmp.eq.s32.totalorder %s20, 0
      %p54 = por %p52, %p53
      %p55 = scmp.ne.s32.totalorder %s44, %s47
      %p56 = scmp.eq.s32.totalorder %s25, 1
      %p57 = por %p55, %p56
      %p58 = scmp.ne.s32.totalorder %s47, %s48
      %p59 = scmp.eq.s32.totalorder %s25, 0
      %p60 = por %p58, %p59
      %p61 = scmp.ne.s32.totalorder %s47, %s48
      %p62 = scmp.eq.s32.totalorder %s26, 1
      %p63 = por %p61, %p62
      %p65 = scmp.ne.s32.totalorder %s48, %s64
      %p66 = scmp.eq.s32.totalorder %s26, 0
      %p67 = por %p65, %p66
      %s68 = sadd.s32 %s28, 1
      %s69 = sadd.s32 %s35, 1
      %s70 = ssub.s32 %s27, %s39
      %s71 = ssub.s32 %s68, %s69
      %s72 = sor.u32 %s70, %s71
      %p73 = scmp.eq.s32.totalorder %s72, 0
      %s75 = sadd.s32 %s74, 1
      %s76 = scalar_select %p73, %s74, %s75
      %p79 = pneg %p73
      %p80 = scmp.eq.s32.totalorder %s20, 1
      %p81 = por %p79, %p80
      %p82 = scmp.ne.s32.totalorder %s74, %s77
      %p83 = scmp.eq.s32.totalorder %s20, 0
      %p84 = por %p82, %p83
      %p85 = scmp.ne.s32.totalorder %s74, %s77
      %p86 = scmp.eq.s32.totalorder %s25, 1
      %p87 = por %p85, %p86
      %p88 = scmp.ne.s32.totalorder %s77, %s78
      %p89 = scmp.eq.s32.totalorder %s25, 0
      %p90 = por %p88, %p89
      %p91 = scmp.ne.s32.totalorder %s77, %s78
      %p92 = scmp.eq.s32.totalorder %s26, 1
      %p93 = por %p91, %p92
      %p95 = scmp.ne.s32.totalorder %s78, %s94
      %p96 = scmp.eq.s32.totalorder %s26, 0
      %p97 = por %p95, %p96
      %s99 = sadd.s32 %s98, 1
      %p102 = scmp.eq.s32.totalorder %s20, 1
      %p103 = scmp.ne.s32.totalorder %s98, %s100
      %p104 = scmp.eq.s32.totalorder %s20, 0
      %p105 = por %p103, %p104
      %p106 = scmp.ne.s32.totalorder %s98, %s100
      %p107 = scmp.eq.s32.totalorder %s25, 1
      %p108 = por %p106, %p107
      %p109 = scmp.ne.s32.totalorder %s100, %s101
      %p110 = scmp.eq.s32.totalorder %s25, 0
      %p111 = por %p109, %p110
      %p112 = scmp.ne.s32.totalorder %s100, %s101
      %p113 = scmp.eq.s32.totalorder %s26, 1
      %p114 = por %p112, %p113
      %p116 = scmp.ne.s32.totalorder %s101, %s115
      %p117 = scmp.eq.s32.totalorder %s26, 0
      %p118 = por %p116, %p117
      %s120 = sadd.s32 %s119, 1
      %p123 = scmp.eq.s32.totalorder %s20, 1
      %p124 = scmp.ne.s32.totalorder %s119, %s121
      %p125 = scmp.eq.s32.totalorder %s20, 0
      %p126 = por %p124, %p125
      %p127 = scmp.ne.s32.totalorder %s119, %s121
      %p128 = scmp.eq.s32.totalorder %s25, 1
      %p129 = por %p127, %p128
      %p130 = scmp.ne.s32.totalorder %s121, %s122
      %p131 = scmp.eq.s32.totalorder %s25, 0
      %p132 = por %p130, %p131
      %p133 = scmp.ne.s32.totalorder %s121, %s122
      %p134 = scmp.eq.s32.totalorder %s26, 1
      %p135 = por %p133, %p134
      %p137 = scmp.ne.s32.totalorder %s122, %s136
      %p138 = scmp.eq.s32.totalorder %s26, 0
      %p139 = por %p137, %p138
      %s140 = ssub.s32 %s27, %s39
      %s141 = ssub.s32 %s28, %s35
      %s142 = sor.u32 %s140, %s141
      %p143 = scmp.eq.s32.totalorder %s142, 0
      %s145 = sadd.s32 %s144, 1
      %s146 = scalar_select %p143, %s144, %s145
      %p149 = pneg %p143
      %p150 = scmp.eq.s32.totalorder %s20, 1
      %p151 = por %p149, %p150
      %p152 = scmp.ne.s32.totalorder %s144, %s147
      %p153 = scmp.eq.s32.totalorder %s20, 0
      %p154 = por %p152, %p153
      %p155 = scmp.ne.s32.totalorder %s144, %s147
      %p156 = scmp.eq.s32.totalorder %s25, 1
      %p157 = por %p155, %p156
      %p158 = scmp.ne.s32.totalorder %s147, %s148
      %p159 = scmp.eq.s32.totalorder %s25, 0
      %p160 = por %p158, %p159
      %p161 = scmp.ne.s32.totalorder %s147, %s148
      %p162 = scmp.eq.s32.totalorder %s26, 1
      %p163 = por %p161, %p162
      %p165 = scmp.ne.s32.totalorder %s148, %s164
      %p166 = scmp.eq.s32.totalorder %s26, 0
      %p167 = por %p165, %p166
      %p168 = scmp.le.s32.totalorder 1, %s20
      %p169 = scmp.lt.s32.totalorder %s20, 3
      %p170 = pnand %p168, %p169
      %p171 = pneg %p170
      // Predicated region
      $region9: #{tpu_custom_call.1} parent=5 // pred_check
        _
      $region10: #{tpu_custom_call.1} parent=5 // pred_check_branch
        %173 = sbr.rel (%p170) target = $region12
      $region11: #{tpu_custom_call.1} parent=5 // pred_region
        %s174 = ssub.s32 %s20, 1
        // Predicated region
        $region13: #{tpu_custom_call.1} parent=11 // pred_check
          %p175 = pneg %p111
        $region14: #{tpu_custom_call.1} parent=11 // pred_check_branch
          %177 = sbr.rel (%p175) target = $region16
        $region15: #{tpu_custom_call.1} parent=11 // pred_region
          %s179 = ssub.s32 128, 128
          %180 = vsyncadd [#allocation7], %s179
          %s182 = sshll.u32 [#allocation8], 4
          %s183 = int_to_ptr.vmem [resolvable:$true] %s182
          %185 = dma.hbm_to_vmem [thread:$0]  %s2, 128, %s183, [#allocation7]
        $region16: #{tpu_custom_call.1} parent=11 // pred_fallthru
          _
        // Predicated region
        $region17: #{tpu_custom_call.1} parent=11 // pred_check
          %p186 = pneg %p132
        $region18: #{tpu_custom_call.1} parent=11 // pred_check_branch
          %188 = sbr.rel (%p186) target = $region20
        $region19: #{tpu_custom_call.1} parent=11 // pred_region
          %s190 = ssub.s32 128, 128
          %191 = vsyncadd [#allocation10], %s190
          %s193 = sshll.u32 [#allocation9], 4
          %s194 = int_to_ptr.vmem [resolvable:$true] %s193
          %196 = dma.hbm_to_vmem [thread:$0]  %s3, 128, %s194, [#allocation10]
        $region20: #{tpu_custom_call.1} parent=11 // pred_fallthru
          _
      $region12: #{tpu_custom_call.1} parent=5 // pred_fallthru
        _
      %p197 = scmp.lt.s32.totalorder %s20, 2
      // Predicated region
      $region21: #{tpu_custom_call.1} parent=5 // pred_check
        %p198 = pneg %p197
      $region22: #{tpu_custom_call.1} parent=5 // pred_check_branch
        %200 = sbr.rel (%p198) target = $region24
      $region23: #{tpu_custom_call.1} parent=5 // pred_region
        // Predicated region
        $region25: #{tpu_custom_call.1} parent=23 // pred_check
          %p201 = pneg %p54
        $region26: #{tpu_custom_call.1} parent=23 // pred_check_branch
          %203 = sbr.rel (%p201) target = $region28
        $region27: #{tpu_custom_call.1} parent=23 // pred_region
          %s204 = sand.u32 %s44, 1
          %s205 = scalar_lea.sflag [#allocation4], %s204
          %s206 = sand.u32 %s44, 1
          %s207 = smul.addr %s206, 4
          %s208 = scalar_lea.vmem [#allocation3], %s207
          %s210 = ssub.s32 64, 64
          %211 = vsyncadd %s205, %s210
          %s212 = smul.addr %s27, 2
          %s213 = sadd.s32 %s28, %s212
          %s214 = smul.addr %s213, 64
          %s215 = scalar_lea.hbm %s0, %s214
          %s217 = sshll.u32 %s208, 4
          %s218 = int_to_ptr.vmem [resolvable:$true] %s217
          %220 = dma.hbm_to_vmem [thread:$0]  %s215, 64, %s218, %s205
        $region28: #{tpu_custom_call.1} parent=23 // pred_fallthru
          _
        // Predicated region
        $region29: #{tpu_custom_call.1} parent=23 // pred_check
          %p221 = pneg %p84
        $region30: #{tpu_custom_call.1} parent=23 // pred_check_branch
          %223 = sbr.rel (%p221) target = $region32
        $region31: #{tpu_custom_call.1} parent=23 // pred_region
          %s224 = sand.u32 %s20, 1
          %s225 = scalar_lea.sflag [#allocation7], %s224
          %s226 = sand.u32 %s74, 1
          %s227 = smul.addr %s226, 4
          %s228 = scalar_lea.vmem [#allocation6], %s227
          %s229 = sadd.s32 %s28, 1
          %s231 = ssub.s32 64, 64
          %232 = vsyncadd %s225, %s231
          %s233 = smul.addr %s27, 2
          %s234 = sadd.s32 %s229, %s233
          %s235 = smul.addr %s234, 64
          %s236 = scalar_lea.hbm %s1, %s235
          %s238 = sshll.u32 %s228, 4
          %s239 = int_to_ptr.vmem [resolvable:$true] %s238
          %241 = dma.hbm_to_vmem [thread:$0]  %s236, 64, %s239, %s225
        $region32: #{tpu_custom_call.1} parent=23 // pred_fallthru
          _
      $region24: #{tpu_custom_call.1} parent=5 // pred_fallthru
        _
      %p242 = scmp.le.s32.totalorder 1, %s20
      %p243 = scmp.lt.s32.totalorder %s20, 3
      %p244 = pnand %p242, %p243
      %p245 = pneg %p244
      // Predicated region
      $region33: #{tpu_custom_call.1} parent=5 // pred_check
        _
      $region34: #{tpu_custom_call.1} parent=5 // pred_check_branch
        %247 = sbr.rel (%p244) target = $region36
      $region35: #{tpu_custom_call.1} parent=5 // pred_region
        %s248 = ssub.s32 %s20, 1
        %s249 = sand.u32 %s47, 1
        %s250 = scalar_lea.sflag [#allocation4], %s249
        %s251 = sand.u32 %s47, 1
        %s252 = smul.addr %s251, 4
        %s253 = scalar_lea.vmem [#allocation3], %s252
        // Predicated region
        $region37: #{tpu_custom_call.1} parent=35 // pred_check
          %p254 = pneg %p60
        $region38: #{tpu_custom_call.1} parent=35 // pred_check_branch
          %256 = sbr.rel (%p254) target = $region40
        $region39: #{tpu_custom_call.1} parent=35 // pred_region
          %257 = dma.done %s250, 64
        $region40: #{tpu_custom_call.1} parent=35 // pred_fallthru
          _
        %s258 = sand.u32 %s25, 1
        %s259 = scalar_lea.sflag [#allocation7], %s258
        %s260 = sand.u32 %s77, 1
        %s261 = smul.addr %s260, 4
        %s262 = scalar_lea.vmem [#allocation6], %s261
        // Predicated region
        $region41: #{tpu_custom_call.1} parent=35 // pred_check
          %p263 = pneg %p90
        $region42: #{tpu_custom_call.1} parent=35 // pred_check_branch
          %265 = sbr.rel (%p263) target = $region44
        $region43: #{tpu_custom_call.1} parent=35 // pred_region
          %266 = dma.done %s259, 64
        $region44: #{tpu_custom_call.1} parent=35 // pred_fallthru
          _
        // Predicated region
        $region45: #{tpu_custom_call.1} parent=35 // pred_check
          %p267 = pneg %p111
        $region46: #{tpu_custom_call.1} parent=35 // pred_check_branch
          %269 = sbr.rel (%p267) target = $region48
        $region47: #{tpu_custom_call.1} parent=35 // pred_region
          %270 = dma.done [#allocation7], 128
        $region48: #{tpu_custom_call.1} parent=35 // pred_fallthru
          _
        // Predicated region
        $region49: #{tpu_custom_call.1} parent=35 // pred_check
          %p271 = pneg %p132
        $region50: #{tpu_custom_call.1} parent=35 // pred_check_branch
          %273 = sbr.rel (%p271) target = $region52
        $region51: #{tpu_custom_call.1} parent=35 // pred_region
          %274 = dma.done [#allocation10], 128
        $region52: #{tpu_custom_call.1} parent=35 // pred_fallthru
          _
        %s275 = sand.u32 %s47, 1
        %s276 = scalar_lea.sflag [#allocation4], %s275
        %s277 = sand.u32 %s47, 1
        %s278 = smul.addr %s277, 4
        %s279 = scalar_lea.vmem [#allocation3], %s278
        %p280 = pneg %p60
        %p281 = pneg %p57
        %s282 = sand.u32 %s25, 1
        %s283 = scalar_lea.sflag [#allocation7], %s282
        %s284 = sand.u32 %s77, 1
        %s285 = smul.addr %s284, 4
        %s286 = scalar_lea.vmem [#allocation6], %s285
        %p287 = pneg %p90
        %p288 = pneg %p87
        %p289 = pneg %p111
        %p290 = pneg %p108
        %p291 = pneg %p132
        %p292 = pneg %p129
        %p293 = pneg %p160
        %p294 = pneg %p157
        %s295 = sand.u32 %s147, 1
        %s296 = scalar_lea.sflag [#allocation5], %s295
        %s297 = sand.u32 %s147, 1
        %s298 = smul.addr %s297, 8
        %s299 = scalar_lea.vmem [#allocation11], %s298
        %s300 = sadd.s32 %s30, 1
        %v301 = vld [vmem:[%s253] sm:$0xf]
        %v302 = vld [vmem:[%s262] sm:$0xf]
        %303 = vst [vmem:[#allocation2] sm:$0xf] %v301
        %306 = vrot.lane.b32.xlu0 %v301, 127
        %v307 = vpop.permute.xlu0 %306
        %308 = vrot.lane.b32.xlu0 %v302, 127
        %v309 = vpop.permute.xlu0 %308
        %vm310 = vcmask 1039360
        %v311 = vsel %vm310, %v307, %v309
        %313 = vst [vmem:[#allocation2 + $0x4] sm:$0xf] %v311
        %314 = vrot.lane.b32.xlu0 %v301, 126
        %v315 = vpop.permute.xlu0 %314
        %316 = vrot.lane.b32.xlu0 %v302, 126
        %v317 = vpop.permute.xlu0 %316
        %vm318 = vcmask 1031168
        %v319 = vsel %vm318, %v315, %v317
        %321 = vst [vmem:[#allocation2 + $0x8] sm:$0xf] %v319
        %v322 = vld [vmem:[#allocation8] sm:$0x3f]
        %v323 = vld [vmem:[#allocation2] sm:$0xff]
        %v324 = vld [vmem:[#allocation2 + $0x8] sm:$0xf]
        %v325 = vld [vmem:[#allocation9] sm:$0x3f]
        %327 = vset.pattern.permute.xlu0 0
        %328 = vperm.xlu0 %327, %v325
        %v329 = vpop.permute.xlu0 %328
        %vm331 = vcmask 97280
        %v333 = vsel %vm331, %v322, 0
        %vm335 = vcmask 1043456
        %v337 = vsel %vm335, %v324, 0
        %339 = vmatprep.subr.mxu0 0.0
        %340 = vmatpush1.msra.mxu0 %v323
        %341 = vmatprep.subr.mxu0 0.0
        %342 = vmatpush1.msra.mxu0 %v337
        %343 = vmatprep.subr.mxu0 0.0
        %344 = vmatpush1.msra.mxu0 0.0
        %345 = vmatprep.subr.mxu0 0.0
        %346 = vmatpush1.msra.mxu0 0.0
        %347 = vmatprep.subr.mxu0 0.0
        %348 = vmatpush1.msra.mxu0 0.0
        %349 = vmatprep.subr.mxu0 0.0
        %350 = vmatpush1.msra.mxu0 0.0
        %351 = vmatprep.subr.mxu0 0.0
        %352 = vmatpush1.msra.mxu0 0.0
        %353 = vmatprep.subr.mxu0 0.0
        %354 = vmatpush1.msra.mxu0 0.0
        %355 = vmatprep.subr.mxu0 0.0
        %356 = vmatpush1.msra.mxu0 0.0
        %357 = vmatprep.subr.mxu0 0.0
        %358 = vmatpush1.msra.mxu0 0.0
        %359 = vmatprep.subr.mxu0 0.0
        %360 = vmatpush1.msra.mxu0 0.0
        %361 = vmatprep.subr.mxu0 0.0
        %362 = vmatpush1.msra.mxu0 0.0
        %363 = vmatprep.subr.mxu0 0.0
        %364 = vmatpush1.msra.mxu0 0.0
        %365 = vmatprep.subr.mxu0 0.0
        %366 = vmatpush1.msra.mxu0 0.0
        %367 = vmatprep.subr.mxu0 0.0
        %368 = vmatpush1.msra.mxu0 0.0
        %369 = vmatprep.subr.mxu0 0.0
        %370 = vmatpush1.msra.mxu0 0.0
        %371 = vmatprep.subr.mxu0 0.0
        %372 = vmatpush1.msra.mxu0 0.0
        %373 = vmatprep.subr.mxu0 0.0
        %374 = vmatpush1.msra.mxu0 0.0
        %375 = vmatprep.subr.mxu0 0.0
        %376 = vmatpush1.msra.mxu0 0.0
        %377 = vmatprep.subr.mxu0 0.0
        %378 = vmatpush1.msra.mxu0 0.0
        %379 = vmatprep.subr.mxu0 0.0
        %380 = vmatpush1.msra.mxu0 0.0
        %381 = vmatprep.subr.mxu0 0.0
        %382 = vmatpush1.msra.mxu0 0.0
        %383 = vmatprep.subr.mxu0 0.0
        %384 = vmatpush1.msra.mxu0 0.0
        %385 = vmatprep.subr.mxu0 0.0
        %386 = vmatpush1.msra.mxu0 0.0
        %387 = vmatprep.subr.mxu0 0.0
        %388 = vmatpush1.msra.mxu0 0.0
        %389 = vmatprep.subr.mxu0 0.0
        %390 = vmatpush1.msra.mxu0 0.0
        %391 = vmatprep.subr.mxu0 0.0
        %392 = vmatpush1.msra.mxu0 0.0
        %393 = vmatprep.subr.mxu0 0.0
        %394 = vmatpush1.msra.mxu0 0.0
        %395 = vmatprep.subr.mxu0 0.0
        %396 = vmatpush1.msra.mxu0 0.0
        %397 = vmatprep.subr.mxu0 0.0
        %398 = vmatpush1.msra.mxu0 0.0
        %399 = vmatprep.subr.mxu0 0.0
        %400 = vmatpush1.msra.mxu0 0.0
        %401 = vmatprep.subr.mxu0 0.0
        %402 = vmatpush1.msra.mxu0 0.0
        %403 = vmatprep.mubr.f32.mxu0 0.0
        %404 = vmatmul.mubr.f32.gmra.mrb[0].mxu0 %v333
        %v405 = vpop.f32.mrb[0].mxu0
        %v406 = vadd.f32 %v329, %v405
        %v407 = vpop.f32.mrb[0].mxu0
        %408 = vdwg.mxu0
        %409 = vst [vmem:[%s299] sm:$0x3f] %v406
        %s410 = sand.u32 %s147, 1
        %s411 = scalar_lea.sflag [#allocation5], %s410
        %s412 = sand.u32 %s147, 1
        %s413 = smul.addr %s412, 8
        %s414 = scalar_lea.vmem [#allocation11], %s413
        // Predicated region
        $region53: #{tpu_custom_call.1} parent=35 // pred_check
          %p415 = pneg %p157
        $region54: #{tpu_custom_call.1} parent=35 // pred_check_branch
          %417 = sbr.rel (%p415) target = $region56
        $region55: #{tpu_custom_call.1} parent=35 // pred_region
          %s419 = ssub.s32 128, 128
          %420 = vsyncadd %s411, %s419
          %s421 = sadd.s32 %s30, %s29
          %s422 = smul.addr %s421, 128
          %s423 = scalar_lea.hbm %s4, %s422
          %s425 = sshll.u32 %s414, 4
          %s426 = int_to_ptr.vmem [resolvable:$true] %s425
          %428 = dma.vmem_to_hbm [thread:$0]  %s426, 128, %s423, %s411
        $region56: #{tpu_custom_call.1} parent=35 // pred_fallthru
          _
      $region36: #{tpu_custom_call.1} parent=5 // pred_fallthru
        _
      %p429 = scmp.le.s32.totalorder 2, %s20
      // Predicated region
      $region57: #{tpu_custom_call.1} parent=5 // pred_check
        %p430 = pneg %p429
      $region58: #{tpu_custom_call.1} parent=5 // pred_check_branch
        %432 = sbr.rel (%p430) target = $region60
      $region59: #{tpu_custom_call.1} parent=5 // pred_region
        %s433 = ssub.s32 %s20, 2
        // Predicated region
        $region61: #{tpu_custom_call.1} parent=59 // pred_check
          %p434 = pneg %p163
        $region62: #{tpu_custom_call.1} parent=59 // pred_check_branch
          %436 = sbr.rel (%p434) target = $region64
        $region63: #{tpu_custom_call.1} parent=59 // pred_region
          %s437 = sand.u32 %s148, 1
          %s438 = scalar_lea.sflag [#allocation5], %s437
          %s439 = sand.u32 %s148, 1
          %s440 = smul.addr %s439, 8
          %s441 = scalar_lea.vmem [#allocation11], %s440
          %442 = dma.done %s438, 128
        $region64: #{tpu_custom_call.1} parent=59 // pred_fallthru
          _
      $region60: #{tpu_custom_call.1} parent=5 // pred_fallthru
        _
    $region6: #{tpu_custom_call.1} parent=1 // loop_footer
      %s24 = sadd.s32 1, %s20
    $region7: #{tpu_custom_call.1} parent=1 // loop_footer_branch
      %19 = sbr.rel target = $region3
    $region8: #{tpu_custom_call.1} parent=1 // loop_exit
      _
    %443 = vsyncpa [#allocation4], 1
    %s444 = scalar_lea.sflag [#allocation4], 1
    %445 = vsyncpa %s444, 1
    %446 = vsyncpa [#allocation7], 1
    %s447 = scalar_lea.sflag [#allocation7], 1
    %448 = vsyncpa %s447, 1
    %449 = vsyncpa [#allocation10], 1
    %450 = vsyncpa [#allocation5], 1
    %s451 = scalar_lea.sflag [#allocation5], 1
    %452 = vsyncpa %s451, 1

</llo_original>
